<compile_context>
chip_gen: v5e
topology: v5e:2x2
jax: 0.10.0
libtpu: 0.0.40
codegen_flags: <defaults>
</compile_context>

<pallas_src>
import jax
import jax.numpy as jnp
from jax.experimental import pallas as pl
from jax.experimental.pallas import tpu as pltpu

_LANE = 128
_BATCH_TILE_CAP = 8192          # 8192 * 128 * 4 B = 4 MiB per f32 input buffer
_SPLIT_THRESHOLD = 2048         # above this, guarantee >=2 grid steps (v7x megacore)
_FAST_PATH_BYTES = 256 * 1024   # below this, plain JAX beats a kernel launch


# ----------------------------------------------------------------------------
# Host-side glue: exact port of Probe.index_init (computes the scalar index).
# Note: mirrors the original's quirk of testing `i >= pad + Ny` with the
# already-padded Ny (same behavior as the torch reference).
# ----------------------------------------------------------------------------
def index_init(Nx, Ny, pad, lattice, index):
    ind = 0
    ind_ = 0
    real_index = -1
    if lattice == 'square':
        for i in range(int(Ny)):
            for j in range(int(Nx)):
                if i < pad or i >= pad + int(Ny):
                    pass
                elif j < pad or j >= pad + int(Nx):
                    pass
                else:
                    if index == ind_:
                        return ind
                    ind_ += 1
                ind += 1
    elif lattice == 'hex':
        for i in range(int(Ny)):
            if i % 2 == 0:
                for j in range(int(Nx)):
                    if i < pad or i >= pad + int(Ny):
                        pass
                    elif j < pad or j >= pad + int(Nx):
                        pass
                    else:
                        if index == ind_:
                            return ind
                        ind_ += 1
                    ind += 1
            else:
                for j in range(int(Nx) - 1):
                    if i < pad or i >= pad + int(Ny):
                        pass
                    elif j < pad or j >= pad + int(Nx) - 1:
                        pass
                    else:
                        if index == ind_:
                            return ind
                        ind_ += 1
                    ind += 1
    return real_index


def hex_num_nodes(Nx, Ny):
    """Total number of nodes in a hex lattice with Nx columns, Ny rows."""
    n = 0
    for i in range(Ny):
        n += Nx if i % 2 == 0 else (Nx - 1)
    return n


# ----------------------------------------------------------------------------
# Pallas kernel: extract one column from the state tile (optionally squared).
# ----------------------------------------------------------------------------
def _make_probe_kernel(local_idx, square):
    """local_idx: static int lane offset inside the fetched lane block.
    square: static bool -- True for IntensityProbe forward (|.|^2)."""

    def kernel(state_ref, out_ref):
        blk = state_ref[...]                           # (B_tile, lane_blk)
        col = blk[:, local_idx:local_idx + 1]          # static lane slice -> (B_tile, 1)
        val = col.astype(jnp.float32)                  # upcast only the probed column
        if square:
            val = val * val
        out_ref[...] = val.astype(out_ref.dtype)

    return kernel


def _round_up(x, m):
    return ((x + m - 1) // m) * m


def _pick_batch_tile(B):
    if B < _SPLIT_THRESHOLD:
        # Single block whose sublane extent equals the full batch dim
        # (always a legal block shape, no padding needed).
        return B
    # Large batch: multiple of 8 sublanes, >= 2 grid steps (so v7x's two
    # TensorCores both get work under "parallel"), capped so a buffer is
    # at most 4 MiB (f32) -- safe under every generation's scoped VMEM.
    return min(_round_up(pl.cdiv(B, 2), 8), _BATCH_TILE_CAP)


def probe_forward(state, index, *, square, force_pallas=False):
    """state: (B, N) float array; index: python int.
    Returns (B,) = state[:, index] (** 2 if square)."""
    B, N = state.shape
    index = int(index)
    if index < 0 or index >= N:
        raise ValueError(f"probe index {index} out of range for N={N}")

    # Lane blocking: fetch only the 128-lane block that holds the column.
    if N >= _LANE:
        lane_blk = _LANE
        blk_idx, local_idx = divmod(index, _LANE)
    else:
        lane_blk = N            # full-dim block (satisfies the (8,128) rule)
        blk_idx, local_idx = 0, index

    # Fast path: for tiny workloads the kernel launch dwarfs the work.
    itemsize = jnp.dtype(state.dtype).itemsize
    if not force_pallas and B * lane_blk * itemsize < _FAST_PATH_BYTES:
        col = state[:, index]
        return col * col if square else col

    B_tile = _pick_batch_tile(B)
    num_steps = pl.cdiv(B, B_tile)   # trailing partial block is masked by Pallas
    grid = (num_steps,)

    in_spec_kwargs = {}
    if num_steps >= 3:
        # Deeper buffering hides the strided (descriptor-bound) input DMA.
        in_spec_kwargs["pipeline_mode"] = pl.Buffered(3)

    out = pl.pallas_call(
        _make_probe_kernel(local_idx, square),
        out_shape=jax.ShapeDtypeStruct((B, 1), state.dtype),
        grid=grid,
        in_specs=[pl.BlockSpec((B_tile, lane_blk), lambda i: (i, blk_idx),
                               **in_spec_kwargs)],
        out_specs=pl.BlockSpec((B_tile, 1), lambda i: (i, 0)),
        compiler_params=pltpu.CompilerParams(
            dimension_semantics=("parallel",)),
    )(state)
    return out[:, 0]


class IntensityProbePallas:
    """JAX/Pallas equivalent of the PyTorch IntensityProbe module."""

    def __init__(self, index, Nx, Ny, pad=0, lattice='hex'):
        self.lattice = lattice
        self.Nx_pad = Nx + pad * 2
        self.Ny_pad = Ny + pad * 2
        real_index = index_init(self.Nx_pad, self.Ny_pad, pad, lattice, index)
        if real_index < 0:
            raise ValueError("probe index not found in (padded) lattice")
        self.index = int(real_index)

    def __call__(self, state):
        # IntensityProbe.forward: probed displacement squared.
        return probe_forward(state, self.index, square=True)

    def displacements(self, state):
        # Probe.forward: raw probed displacement.
        return probe_forward(state, self.index, square=False)

    def coordinates(self):
        return self.index


if __name__ == "__main__":
    # ---- Case 1: small problem consistent with the module -------------------
    # hex lattice, Nx=4, Ny=4, pad=1 -> padded 6x6 hex lattice => 33 nodes.
    Nx, Ny, pad = 4, 4, 1
    lattice = 'hex'
    probe_idx = 3  # which interior node to probe

    probe = IntensityProbePallas(probe_idx, Nx, Ny, pad=pad, lattice=lattice)

    B = 2
    N = hex_num_nodes(Nx + 2 * pad, Ny + 2 * pad)  # 33 nodes in padded hex lattice
    key = jax.random.PRNGKey(0)
    state = jax.random.normal(key, (B, N), dtype=jnp.float32)

    # Force the Pallas path so the kernel itself is exercised at demo scale.
    out = jax.block_until_ready(
        probe_forward(state, probe.index, square=True, force_pallas=True))
    disp = jax.block_until_ready(
        probe_forward(state, probe.index, square=False, force_pallas=True))

    ref = state[:, probe.index] ** 2
    ref_disp = state[:, probe.index]
    assert out.shape == (B,)
    assert jnp.allclose(out, ref, rtol=1e-6, atol=1e-6), (out, ref)
    assert jnp.allclose(disp, ref_disp, rtol=1e-6, atol=1e-6), (disp, ref_disp)

    # Class API (may take the plain-JAX fast path for tiny inputs).
    out_cls = jax.block_until_ready(probe(state))
    assert jnp.allclose(out_cls, ref, rtol=1e-6, atol=1e-6), (out_cls, ref)

    # ---- Case 2: exercise a nonzero 128-lane block index --------------------
    B2, N2, idx2 = 16, 300, 200   # block 1, local lane 72
    key2 = jax.random.PRNGKey(1)
    state2 = jax.random.normal(key2, (B2, N2), dtype=jnp.float32)
    out2 = jax.block_until_ready(
        probe_forward(state2, idx2, square=True, force_pallas=True))
    ref2 = state2[:, idx2] ** 2
    assert out2.shape == (B2,)
    assert jnp.allclose(out2, ref2, rtol=1e-6, atol=1e-6), (out2, ref2)

    print("KERNEL_OK")
</pallas_src>

<mosaic_0001>
module attributes {stable_mosaic.version = 11 : i64} {
  func.func @kernel(%arg0: i32, %arg1: memref<2x33xf32, #tpu.memory_space<vmem>>, %arg2: memref<2x1xf32, #tpu.memory_space<vmem>>) attributes {dimension_semantics = [#tpu.dimension_semantics<parallel>], iteration_bounds = array<i64: 1>, scalar_prefetch = 0 : i64, scratch_operands = 0 : i64, tpu.core_type = #tpu.core_type<tc>, window_params = [{transform_indices = @transform_0, window_bounds = array<i64: 2, 33>}, {transform_indices = @transform_1, window_bounds = array<i64: 2, 1>}]} {
    %c0 = arith.constant 0 : index
    %c0_0 = arith.constant 0 : index
    %0 = vector.load %arg1[%c0, %c0_0] : memref<2x33xf32, #tpu.memory_space<vmem>>, vector<2x33xf32>
    %1 = vector.extract_strided_slice %0 {offsets = [0, 10], sizes = [2, 1], strides = [1, 1]} : vector<2x33xf32> to vector<2x1xf32>
    %2 = arith.mulf %1, %1 : vector<2x1xf32>
    %c0_1 = arith.constant 0 : index
    %c0_2 = arith.constant 0 : index
    %3 = vector.load %arg2[%c0_1, %c0_2] : memref<2x1xf32, #tpu.memory_space<vmem>>, vector<2x1xf32>
    tpu.vector_store %arg2[%c0_1, %c0_2], %2 {strides = array<i32>} : memref<2x1xf32, #tpu.memory_space<vmem>>, vector<2x1xf32>,
    return
  }
  func.func @transform_0(%arg0: i32) -> (i32, i32) {
    %c0_i32 = arith.constant 0 : i32
    %c0_i32_0 = arith.constant 0 : i32
    return %arg0, %c0_i32 : i32, i32
  }
  func.func @transform_1(%arg0: i32) -> (i32, i32) {
    %c0_i32 = arith.constant 0 : i32
    %c0_i32_0 = arith.constant 0 : i32
    return %arg0, %c0_i32 : i32, i32
  }
}

</mosaic_0001>

<llo_original>
// kernel: tpu_custom_call.1
$region0: #{tpu_custom_call.1}
  #allocation0 [shape = 'u32[]', space=smem, size = 0x4, offset = 0x4, fixed_abs, tag = 'smem constant byte address 0x4 - core index']
  #allocation1 [shape = 'u32[72,128]{1,0:T(1,128)}', space=vmem, size = 0x9000, scoped, tag = 'internal scratch']
  %s0 = inlined_call_operand.hbm [shape: f32[2,33], index: 0, kind: input, shape index: {}]
  %s1 = inlined_call_operand.vmem [shape: f32[2,1], index: 1, kind: output, shape index: {}]
  %s2 = sld [smem:[#allocation0]]
  $region18: #{tpu_custom_call.1} parent=0
    _
  %s4 = ssub.s32 1, %s2
  %s5 = scalar_select 0, %s4, %s2
  $region1: #{tpu_custom_call.1} parent=0
    #allocation2 [shape = 'u8[1024]{0}', space=vmem, size = 0x400, scoped, tag = 'input window, operand 0, single buffered']
    #allocation3 [shape = 's32[1]{0}', space=sflag, size = 0x4, scoped, tag = 'scoped memory for tpu_custom_call.1']
    %6 = vsyncpa [#allocation3], 0
    // Predicated region
    $region2: #{tpu_custom_call.1} parent=1 // pred_check
      _
    $region3: #{tpu_custom_call.1} parent=1 // pred_check_branch
      %8 = sbr.rel (0) target = $region5
    $region4: #{tpu_custom_call.1} parent=1 // pred_region
      %10 = vsyncadd [#allocation3], 0
      %s12 = sshll.u32 %s0, 4
      %s13 = int_to_ptr.hbm [resolvable:$true] %s12
      %s14 = sshll.u32 [#allocation2], 4
      %s15 = int_to_ptr.vmem [resolvable:$true] %s14
      %17 = dma.hbm_to_vmem [thread:$0]  %s13, 32, %s15, [#allocation3]
    $region5: #{tpu_custom_call.1} parent=1 // pred_fallthru
      _
    // Predicated region
    $region6: #{tpu_custom_call.1} parent=1 // pred_check
      _
    $region7: #{tpu_custom_call.1} parent=1 // pred_check_branch
      %19 = sbr.rel (0) target = $region9
    $region8: #{tpu_custom_call.1} parent=1 // pred_region
      %21 = dma.done [#allocation3], 32
    $region9: #{tpu_custom_call.1} parent=1 // pred_fallthru
      _
    %v22 = vld [vmem:[#allocation2] sm:$0x3]
    %v23 = vmul.f32 %v22, %v22
    %25 = vrot.lane.b32.xlu0 %v23, 118
    %v26 = vpop.permute.xlu0 %25
    %vm28 = vcmask 1024
    %29 = vst.msk [vmem:[%s1] sm:$0x3] %vm28, %v26
    // Predicated region
    $region10: #{tpu_custom_call.1} parent=1 // pred_check
      _
    $region11: #{tpu_custom_call.1} parent=1 // pred_check_branch
      %31 = sbr.rel (0) target = $region13
    $region12: #{tpu_custom_call.1} parent=1 // pred_region
      _
    $region13: #{tpu_custom_call.1} parent=1 // pred_fallthru
      _
    // Predicated region
    $region14: #{tpu_custom_call.1} parent=1 // pred_check
      _
    $region15: #{tpu_custom_call.1} parent=1 // pred_check_branch
      %33 = sbr.rel (0) target = $region17
    $region16: #{tpu_custom_call.1} parent=1 // pred_region
      _
    $region17: #{tpu_custom_call.1} parent=1 // pred_fallthru
      _
    %34 = vsyncpa [#allocation3], 1

</llo_original>
